<compile_context>
chip_gen: v5e
topology: v5e:2x2
jax: 0.10.0
libtpu: 0.0.40
codegen_flags: <defaults>
</compile_context>

<pallas_src>
import functools

import jax
import jax.numpy as jnp
from jax.experimental import pallas as pl
from jax.experimental.pallas import tpu as pltpu

HIDDEN = 64
DPAD = 128  # padded lane width for every feature dim


def policy_kernel(x_ref, w_ref, b_ref, q_ref, *, batch, actions):
    # x_ref : (B_pad, 128)   bf16, zero-padded input
    # w_ref : (4, 128, 128)  bf16 packed weights [fc1, fc2, fused v/a hidden, fused out]
    # b_ref : (4, 128)       f32 packed biases
    # q_ref : (B_pad, 128)   f32 lane-dense output; real q lives in cols 1..actions
    x = x_ref[...]
    b = b_ref[...]

    # fc1 + relu  (padded rows/cols of W are zero -> numerically inert)
    h = jnp.dot(x, w_ref[0], preferred_element_type=jnp.float32) + b[0:1, :]
    h = jnp.maximum(h, 0.0)

    # fc2 + relu
    h = jnp.dot(h.astype(jnp.bfloat16), w_ref[1],
                preferred_element_type=jnp.float32) + b[1:2, :]
    h = jnp.maximum(h, 0.0)

    # fused value/advantage hidden layer: cols 0..63 = vh, cols 64..127 = ah
    head = jnp.dot(h.astype(jnp.bfloat16), w_ref[2],
                   preferred_element_type=jnp.float32) + b[2:3, :]
    head = jnp.maximum(head, 0.0)

    # fused block-diagonal output:
    #   col 0            = v
    #   cols 1..A        = a
    #   col A+1          = sum_j a_ij  (row-sum folded into the matmul)
    #   cols > A+1       = 0
    out = jnp.dot(head.astype(jnp.bfloat16), w_ref[3],
                  preferred_element_type=jnp.float32) + b[3:4, :]

    # dueling combine: q = v + a - mean(a).
    # mean(a) = (row-masked sum of the folded sum column) / (batch * actions).
    # Padded batch rows carry nonzero activations (bias propagation through
    # relu), so the row mask is required.
    sum_col = out[:, actions + 1:actions + 2]                     # (B_pad, 1)
    row = jax.lax.broadcasted_iota(jnp.int32, sum_col.shape, 0)
    mean_a = jnp.sum(jnp.where(row < batch, sum_col, 0.0)) * (
        1.0 / float(batch * actions))

    v = out[:, 0:1]                       # (B_pad, 1) -> broadcast over lanes
    # NOTE: cols 0 and > actions of q_ref are NOT meaningful q values; the
    # wrapper slices cols 1..actions.
    q_ref[...] = out + v - mean_a


def pack_params(params, image_dims, hidden, action_shape):
    """Pack 12 layer tensors into a bf16 (4,128,128) weight blob and f32 (4,128) bias blob."""
    (w1, b1, w2, b2, wv, bv, wvo, bvo, wa, ba, wao, bao) = params
    W = jnp.zeros((4, DPAD, DPAD), jnp.float32)
    B = jnp.zeros((4, DPAD), jnp.float32)

    # layer 0: fc1
    W = W.at[0, :image_dims, :hidden].set(w1)
    B = B.at[0, :hidden].set(b1[0])
    # layer 1: fc2
    W = W.at[1, :hidden, :hidden].set(w2)
    B = B.at[1, :hidden].set(b2[0])
    # layer 2: fused value|advantage hidden  (cols 0..H-1 = wv, cols H..2H-1 = wa)
    W = W.at[2, :hidden, :hidden].set(wv)
    W = W.at[2, :hidden, hidden:2 * hidden].set(wa)
    B = B.at[2, :hidden].set(bv[0])
    B = B.at[2, hidden:2 * hidden].set(ba[0])
    # layer 3: block-diagonal output
    #   rows 0..H-1   col 0          = wvo            (value)
    #   rows H..2H-1  cols 1..A      = wao            (advantage)
    #   rows H..2H-1  col A+1        = sum_j wao[:,j] (folded advantage row-sum)
    W = W.at[3, :hidden, 0].set(wvo[0])
    W = W.at[3, hidden:2 * hidden, 1:1 + action_shape].set(wao)
    W = W.at[3, hidden:2 * hidden, 1 + action_shape].set(jnp.sum(wao, axis=1))
    B = B.at[3, 0].set(bvo[0, 0])
    B = B.at[3, 1:1 + action_shape].set(bao[0])
    B = B.at[3, 1 + action_shape].set(jnp.sum(bao[0]))
    return W.astype(jnp.bfloat16), B


def policy_forward(x, packed_w, packed_b, image_dims, action_shape):
    batch = x.shape[0]
    # bf16 activations tile as (16,128) sublanes -> pad batch to a multiple of 16
    b_pad = max(16, ((batch + 15) // 16) * 16)

    # zero-pad input to (B_pad, 128) bf16 so the x DMA / matmuls are lane-dense
    x_pad = jnp.zeros((b_pad, DPAD), jnp.bfloat16).at[:batch, :image_dims].set(
        x.astype(jnp.bfloat16))

    kernel = functools.partial(policy_kernel, batch=batch, actions=action_shape)
    vmem = pl.BlockSpec(memory_space=pltpu.MemorySpace.VMEM)

    flops = 2 * b_pad * 4 * DPAD * DPAD
    bytes_accessed = (2 * x_pad.size + 2 * packed_w.size + 4 * packed_b.size
                      + 4 * b_pad * DPAD)

    q_full = pl.pallas_call(
        kernel,
        out_shape=jax.ShapeDtypeStruct((b_pad, DPAD), jnp.float32),
        in_specs=[vmem, vmem, vmem],
        out_specs=vmem,
        cost_estimate=pl.CostEstimate(
            flops=flops, transcendentals=0, bytes_accessed=bytes_accessed),
    )(x_pad, packed_w, packed_b)

    # real q values live in columns 1..A of the lane-dense output tile
    return q_full[:batch, 1:1 + action_shape]


# ------------------------- parameter construction -------------------------

def xavier_uniform(key, fan_in, fan_out):
    # torch.nn.init.xavier_uniform_ on weight (out, in); stored here as (in, out)
    bound = (6.0 / (fan_in + fan_out)) ** 0.5
    return jax.random.uniform(key, (fan_in, fan_out), jnp.float32, -bound, bound)


def linear_bias(key, fan_in, fan_out):
    # torch nn.Linear default bias init: U(-1/sqrt(fan_in), 1/sqrt(fan_in))
    bound = 1.0 / (fan_in ** 0.5)
    return jax.random.uniform(key, (1, fan_out), jnp.float32, -bound, bound)


def make_params(key, image_dims, hidden, action_shape):
    keys = jax.random.split(key, 12)
    w1 = xavier_uniform(keys[0], image_dims, hidden)
    b1 = linear_bias(keys[1], image_dims, hidden)
    w2 = xavier_uniform(keys[2], hidden, hidden)
    b2 = linear_bias(keys[3], hidden, hidden)
    wv = xavier_uniform(keys[4], hidden, hidden)
    bv = linear_bias(keys[5], hidden, hidden)
    wvo = xavier_uniform(keys[6], hidden, 1).T          # stored as (1, hidden)
    bvo = linear_bias(keys[7], hidden, 1)               # (1, 1)
    wa = xavier_uniform(keys[8], hidden, hidden)
    ba = linear_bias(keys[9], hidden, hidden)
    wao = xavier_uniform(keys[10], hidden, action_shape)
    bao = linear_bias(keys[11], hidden, action_shape)
    return (w1, b1, w2, b2, wv, bv, wvo, bvo, wa, ba, wao, bao)


def reference_forward_f32(x, params):
    """Pure f32 reference matching the torch module semantics."""
    (w1, b1, w2, b2, wv, bv, wvo, bvo, wa, ba, wao, bao) = params
    h1 = jnp.maximum(x @ w1 + b1, 0.0)
    h2 = jnp.maximum(h1 @ w2 + b2, 0.0)
    v = jnp.maximum(h2 @ wv + bv, 0.0) @ wvo.T + bvo
    a = jnp.maximum(h2 @ wa + ba, 0.0) @ wao + bao
    return v + a - jnp.mean(a)


def reference_forward_bf16(x, packed_w, packed_b, image_dims, action_shape):
    """Emulates the kernel numerics (bf16 MXU inputs, f32 accum) in plain JAX."""
    batch = x.shape[0]
    xp = jnp.zeros((batch, DPAD), jnp.bfloat16).at[:, :image_dims].set(
        x.astype(jnp.bfloat16))
    h = jnp.maximum(jnp.dot(xp, packed_w[0], preferred_element_type=jnp.float32)
                    + packed_b[0][None, :], 0.0)
    h = jnp.maximum(jnp.dot(h.astype(jnp.bfloat16), packed_w[1],
                            preferred_element_type=jnp.float32)
                    + packed_b[1][None, :], 0.0)
    head = jnp.maximum(jnp.dot(h.astype(jnp.bfloat16), packed_w[2],
                               preferred_element_type=jnp.float32)
                       + packed_b[2][None, :], 0.0)
    out = jnp.dot(head.astype(jnp.bfloat16), packed_w[3],
                  preferred_element_type=jnp.float32) + packed_b[3][None, :]
    mean_a = jnp.sum(out[:, action_shape + 1]) / float(batch * action_shape)
    q = out + out[:, 0:1] - mean_a
    return q[:, 1:1 + action_shape]


if __name__ == "__main__":
    # Small synthetic config: obs_shape=4 -> image_dims = 4*4*3 + 4 = 52
    obs_shape = 4
    action_shape = 5
    hidden = HIDDEN
    image_dims = obs_shape * obs_shape * 3 + 4
    batch = 8

    key = jax.random.PRNGKey(0)
    kx, kp = jax.random.split(key)
    x = jax.random.normal(kx, (batch, image_dims), jnp.float32)
    params = make_params(kp, image_dims, hidden, action_shape)

    # pack once at param-prep time (2 blobs -> 3 input DMAs total)
    packed_w, packed_b = pack_params(params, image_dims, hidden, action_shape)

    q = policy_forward(x, packed_w, packed_b, image_dims, action_shape)
    jax.block_until_ready(q)
    assert q.shape == (batch, action_shape)

    # tight check vs. a bf16-emulating reference (same rounding as the kernel)
    q_bf16 = reference_forward_bf16(x, packed_w, packed_b, image_dims, action_shape)
    assert jnp.allclose(q, q_bf16, atol=1e-3, rtol=1e-3), (
        float(jnp.max(jnp.abs(q - q_bf16))))

    # loose check vs. the f32 torch-semantics reference (bf16 MXU noise allowed)
    q_f32 = reference_forward_f32(x, params)
    assert jnp.allclose(q, q_f32, atol=1e-1, rtol=1e-1), (
        float(jnp.max(jnp.abs(q - q_f32))))

    print("KERNEL_OK")
</pallas_src>

<mosaic_0001>
module attributes {stable_mosaic.version = 11 : i64} {
  func.func @policy_kernel(%arg0: memref<16x128xbf16, #tpu.memory_space<vmem>>, %arg1: memref<4x128x128xbf16, #tpu.memory_space<vmem>>, %arg2: memref<4x128xf32, #tpu.memory_space<vmem>>, %arg3: memref<16x128xf32, #tpu.memory_space<vmem>>) attributes {dimension_semantics = [], scalar_prefetch = 0 : i64, scratch_operands = 0 : i64, tpu.core_type = #tpu.core_type<tc>} {
    %c0 = arith.constant 0 : index
    %c0_0 = arith.constant 0 : index
    %0 = vector.load %arg0[%c0, %c0_0] : memref<16x128xbf16, #tpu.memory_space<vmem>>, vector<16x128xbf16>
    %c0_1 = arith.constant 0 : index
    %c0_2 = arith.constant 0 : index
    %1 = vector.load %arg2[%c0_1, %c0_2] : memref<4x128xf32, #tpu.memory_space<vmem>>, vector<4x128xf32>
    %c0_3 = arith.constant 0 : index
    %c0_4 = arith.constant 0 : index
    %c0_5 = arith.constant 0 : index
    %2 = vector.load %arg1[%c0_3, %c0_4, %c0_5] : memref<4x128x128xbf16, #tpu.memory_space<vmem>>, vector<1x128x128xbf16>
    %3 = vector.shape_cast %2 : vector<1x128x128xbf16> to vector<128x128xbf16>
    %cst = arith.constant dense<0.000000e+00> : vector<16x128xf32>
    %4 = tpu.matmul %0, %3, %cst {dimension_numbers = #tpu.dot_dimension_numbers<[1], [0], [0], [1], [0, 0, 1, 1], [], []>} : vector<16x128xbf16>, vector<128x128xbf16>, vector<16x128xf32> -> vector<16x128xf32>
    %5 = vector.extract_strided_slice %1 {offsets = [0, 0], sizes = [1, 128], strides = [1, 1]} : vector<4x128xf32> to vector<1x128xf32>
    %6 = vector.broadcast %5 : vector<1x128xf32> to vector<16x128xf32>
    %7 = arith.addf %4, %6 : vector<16x128xf32>
    %cst_6 = arith.constant 0.000000e+00 : f32
    %8 = vector.broadcast %cst_6 : f32 to vector<16x128xf32>
    %9 = arith.maximumf %7, %8 : vector<16x128xf32>
    %10 = arith.truncf %9 : vector<16x128xf32> to vector<16x128xbf16>
    %c1 = arith.constant 1 : index
    %c0_7 = arith.constant 0 : index
    %c0_8 = arith.constant 0 : index
    %11 = vector.load %arg1[%c1, %c0_7, %c0_8] : memref<4x128x128xbf16, #tpu.memory_space<vmem>>, vector<1x128x128xbf16>
    %12 = vector.shape_cast %11 : vector<1x128x128xbf16> to vector<128x128xbf16>
    %cst_9 = arith.constant dense<0.000000e+00> : vector<16x128xf32>
    %13 = tpu.matmul %10, %12, %cst_9 {dimension_numbers = #tpu.dot_dimension_numbers<[1], [0], [0], [1], [0, 0, 1, 1], [], []>} : vector<16x128xbf16>, vector<128x128xbf16>, vector<16x128xf32> -> vector<16x128xf32>
    %14 = vector.extract_strided_slice %1 {offsets = [1, 0], sizes = [1, 128], strides = [1, 1]} : vector<4x128xf32> to vector<1x128xf32>
    %15 = vector.broadcast %14 : vector<1x128xf32> to vector<16x128xf32>
    %16 = arith.addf %13, %15 : vector<16x128xf32>
    %cst_10 = arith.constant 0.000000e+00 : f32
    %17 = vector.broadcast %cst_10 : f32 to vector<16x128xf32>
    %18 = arith.maximumf %16, %17 : vector<16x128xf32>
    %19 = arith.truncf %18 : vector<16x128xf32> to vector<16x128xbf16>
    %c2 = arith.constant 2 : index
    %c0_11 = arith.constant 0 : index
    %c0_12 = arith.constant 0 : index
    %20 = vector.load %arg1[%c2, %c0_11, %c0_12] : memref<4x128x128xbf16, #tpu.memory_space<vmem>>, vector<1x128x128xbf16>
    %21 = vector.shape_cast %20 : vector<1x128x128xbf16> to vector<128x128xbf16>
    %cst_13 = arith.constant dense<0.000000e+00> : vector<16x128xf32>
    %22 = tpu.matmul %19, %21, %cst_13 {dimension_numbers = #tpu.dot_dimension_numbers<[1], [0], [0], [1], [0, 0, 1, 1], [], []>} : vector<16x128xbf16>, vector<128x128xbf16>, vector<16x128xf32> -> vector<16x128xf32>
    %23 = vector.extract_strided_slice %1 {offsets = [2, 0], sizes = [1, 128], strides = [1, 1]} : vector<4x128xf32> to vector<1x128xf32>
    %24 = vector.broadcast %23 : vector<1x128xf32> to vector<16x128xf32>
    %25 = arith.addf %22, %24 : vector<16x128xf32>
    %cst_14 = arith.constant 0.000000e+00 : f32
    %26 = vector.broadcast %cst_14 : f32 to vector<16x128xf32>
    %27 = arith.maximumf %25, %26 : vector<16x128xf32>
    %28 = arith.truncf %27 : vector<16x128xf32> to vector<16x128xbf16>
    %c3 = arith.constant 3 : index
    %c0_15 = arith.constant 0 : index
    %c0_16 = arith.constant 0 : index
    %29 = vector.load %arg1[%c3, %c0_15, %c0_16] : memref<4x128x128xbf16, #tpu.memory_space<vmem>>, vector<1x128x128xbf16>
    %30 = vector.shape_cast %29 : vector<1x128x128xbf16> to vector<128x128xbf16>
    %cst_17 = arith.constant dense<0.000000e+00> : vector<16x128xf32>
    %31 = tpu.matmul %28, %30, %cst_17 {dimension_numbers = #tpu.dot_dimension_numbers<[1], [0], [0], [1], [0, 0, 1, 1], [], []>} : vector<16x128xbf16>, vector<128x128xbf16>, vector<16x128xf32> -> vector<16x128xf32>
    %32 = vector.extract_strided_slice %1 {offsets = [3, 0], sizes = [1, 128], strides = [1, 1]} : vector<4x128xf32> to vector<1x128xf32>
    %33 = vector.broadcast %32 : vector<1x128xf32> to vector<16x128xf32>
    %34 = arith.addf %31, %33 : vector<16x128xf32>
    %35 = vector.extract_strided_slice %34 {offsets = [0, 6], sizes = [16, 1], strides = [1, 1]} : vector<16x128xf32> to vector<16x1xf32>
    %36 = tpu.iota {dimensions = array<i32: 0>} : vector<16x1xi32>
    %c8_i32 = arith.constant 8 : i32
    %37 = vector.broadcast %c8_i32 : i32 to vector<16x1xi32>
    %38 = arith.cmpi slt, %36, %37 : vector<16x1xi32>
    %cst_18 = arith.constant 0.000000e+00 : f32
    %39 = vector.broadcast %cst_18 : f32 to vector<16x1xf32>
    %40 = arith.select %38, %35, %39 : vector<16x1xi1>, vector<16x1xf32>
    %41 = vector.shape_cast %40 : vector<16x1xf32> to vector<1x16x1xf32>
    %cst_19 = arith.constant dense<0.000000e+00> : vector<1xf32>
    %42 = vector.multi_reduction <add>, %41, %cst_19 [1, 2] : vector<1x16x1xf32> to vector<1xf32>
    %43 = vector.shape_cast %42 : vector<1xf32> to vector<1x1x1xf32>
    %44 = vector.extract %43[0, 0, 0] : f32 from vector<1x1x1xf32>
    %cst_20 = arith.constant 2.500000e-02 : f32
    %45 = arith.mulf %44, %cst_20 : f32
    %46 = vector.extract_strided_slice %34 {offsets = [0, 0], sizes = [16, 1], strides = [1, 1]} : vector<16x128xf32> to vector<16x1xf32>
    %47 = vector.broadcast %46 : vector<16x1xf32> to vector<16x128xf32>
    %48 = arith.addf %34, %47 : vector<16x128xf32>
    %49 = vector.broadcast %45 : f32 to vector<16x128xf32>
    %50 = arith.subf %48, %49 : vector<16x128xf32>
    %c0_21 = arith.constant 0 : index
    %c0_22 = arith.constant 0 : index
    %51 = vector.load %arg3[%c0_21, %c0_22] : memref<16x128xf32, #tpu.memory_space<vmem>>, vector<16x128xf32>
    tpu.vector_store %arg3[%c0_21, %c0_22], %50 {strides = array<i32>} : memref<16x128xf32, #tpu.memory_space<vmem>>, vector<16x128xf32>,
    return
  }
}

</mosaic_0001>

<llo_original>
// kernel: tpu_custom_call.1
$region0: #{tpu_custom_call.1}
  #allocation0 [shape = 'u32[]', space=smem, size = 0x4, offset = 0x4, fixed_abs, tag = 'smem constant byte address 0x4 - core index']
  #allocation1 [shape = 'u32[72,128]{1,0:T(1,128)}', space=vmem, size = 0x9000, scoped, tag = 'internal scratch']
  %s0 = inlined_call_operand.hbm [shape: bf16[16,128], index: 0, kind: input, shape index: {}]
  %s1 = inlined_call_operand.hbm [shape: bf16[4,128,128], index: 1, kind: input, shape index: {}]
  %s2 = inlined_call_operand.hbm [shape: f32[4,128], index: 2, kind: input, shape index: {}]
  %s3 = inlined_call_operand.hbm [shape: f32[16,128], index: 3, kind: output, shape index: {}]
  %s4 = sld [smem:[#allocation0]]
  $region34: #{tpu_custom_call.1} parent=0
    _
  %s6 = ssub.s32 1, %s4
  %s7 = scalar_select 0, %s6, %s4
  $region1: #{tpu_custom_call.1} parent=0
    #allocation2 [shape = 'u8[4096]{0}', space=vmem, size = 0x1000, scoped, tag = 'input window, operand 0, single buffered']
    #allocation3 [shape = 's32[1]{0}', space=sflag, size = 0x4, scoped, tag = 'scoped memory for tpu_custom_call.1']
    #allocation4 [shape = 's32[1]{0}', space=sflag, size = 0x4, scoped, tag = 'scoped memory for tpu_custom_call.1']
    #allocation5 [shape = 'u8[131072]{0}', space=vmem, size = 0x20000, scoped, tag = 'input window, operand 1, single buffered']
    #allocation6 [shape = 's32[1]{0}', space=sflag, size = 0x4, scoped, tag = 'scoped memory for tpu_custom_call.1']
    #allocation7 [shape = 'u8[2048]{0}', space=vmem, size = 0x800, scoped, tag = 'input window, operand 2, single buffered']
    #allocation8 [shape = 'u8[8192]{0}', space=vmem, size = 0x2000, scoped, tag = 'output window, operand 0, single buffered']
    %8 = vsyncpa [#allocation3], 0
    %9 = vsyncpa [#allocation6], 0
    %10 = vsyncpa [#allocation4], 0
    // Predicated region
    $region2: #{tpu_custom_call.1} parent=1 // pred_check
      _
    $region3: #{tpu_custom_call.1} parent=1 // pred_check_branch
      %12 = sbr.rel (0) target = $region5
    $region4: #{tpu_custom_call.1} parent=1 // pred_region
      %14 = vsyncadd [#allocation3], 0
      %s15 = sshll.u32 %s0, 4
      %s16 = int_to_ptr.hbm [resolvable:$true] %s15
      %s17 = sshll.u32 [#allocation2], 4
      %s18 = int_to_ptr.vmem [resolvable:$true] %s17
      %23 = dma.hbm_to_vmem [thread:$0]  %s16, 128, %s18, [#allocation3], 64, 64, 4
    $region5: #{tpu_custom_call.1} parent=1 // pred_fallthru
      _
    // Predicated region
    $region6: #{tpu_custom_call.1} parent=1 // pred_check
      _
    $region7: #{tpu_custom_call.1} parent=1 // pred_check_branch
      %25 = sbr.rel (0) target = $region9
    $region8: #{tpu_custom_call.1} parent=1 // pred_region
      %27 = vsyncadd [#allocation6], 0
      %s28 = sshll.u32 %s1, 4
      %s29 = int_to_ptr.hbm [resolvable:$true] %s28
      %s30 = sshll.u32 [#allocation5], 4
      %s31 = int_to_ptr.vmem [resolvable:$true] %s30
      %36 = dma.hbm_to_vmem [thread:$0]  %s29, 4096, %s31, [#allocation6], 64, 64, 4
    $region9: #{tpu_custom_call.1} parent=1 // pred_fallthru
      _
    // Predicated region
    $region10: #{tpu_custom_call.1} parent=1 // pred_check
      _
    $region11: #{tpu_custom_call.1} parent=1 // pred_check_branch
      %38 = sbr.rel (0) target = $region13
    $region12: #{tpu_custom_call.1} parent=1 // pred_region
      %40 = vsyncadd [#allocation6], 0
      %s42 = sshll.u32 %s2, 4
      %s43 = int_to_ptr.hbm [resolvable:$true] %s42
      %s44 = sshll.u32 [#allocation7], 4
      %s45 = int_to_ptr.vmem [resolvable:$true] %s44
      %47 = dma.hbm_to_vmem [thread:$0]  %s43, 64, %s45, [#allocation6]
    $region13: #{tpu_custom_call.1} parent=1 // pred_fallthru
      _
    // Predicated region
    $region14: #{tpu_custom_call.1} parent=1 // pred_check
      _
    $region15: #{tpu_custom_call.1} parent=1 // pred_check_branch
      %49 = sbr.rel (0) target = $region17
    $region16: #{tpu_custom_call.1} parent=1 // pred_region
      %51 = dma.done [#allocation3], 128
    $region17: #{tpu_custom_call.1} parent=1 // pred_fallthru
      _
    // Predicated region
    $region18: #{tpu_custom_call.1} parent=1 // pred_check
      _
    $region19: #{tpu_custom_call.1} parent=1 // pred_check_branch
      %53 = sbr.rel (0) target = $region21
    $region20: #{tpu_custom_call.1} parent=1 // pred_region
      %55 = dma.done [#allocation6], 4096
    $region21: #{tpu_custom_call.1} parent=1 // pred_fallthru
      _
    // Predicated region
    $region22: #{tpu_custom_call.1} parent=1 // pred_check
      _
    $region23: #{tpu_custom_call.1} parent=1 // pred_check_branch
      %57 = sbr.rel (0) target = $region25
    $region24: #{tpu_custom_call.1} parent=1 // pred_region
      %59 = dma.done [#allocation6], 64
    $region25: #{tpu_custom_call.1} parent=1 // pred_fallthru
      _
    %v60 = vld [vmem:[#allocation2] sm:$0xf]
    %v61 = vld [vmem:[#allocation2 + $0x4] sm:$0xf]
    %v62 = vld [vmem:[#allocation7] sm:$0xf]
    %v63 = vld [vmem:[#allocation5] sm:$0xf]
    %v64 = vld [vmem:[#allocation5 + $0x4] sm:$0xf]
    %v65 = vld [vmem:[#allocation5 + $0x8] sm:$0xf]
    %v66 = vld [vmem:[#allocation5 + $0xc] sm:$0xf]
    %v67 = vld [vmem:[#allocation5 + $0x10] sm:$0xf]
    %v68 = vld [vmem:[#allocation5 + $0x14] sm:$0xf]
    %v69 = vld [vmem:[#allocation5 + $0x18] sm:$0xf]
    %v70 = vld [vmem:[#allocation5 + $0x1c] sm:$0xf]
    %v71 = vld [vmem:[#allocation5 + $0x20] sm:$0xf]
    %v72 = vld [vmem:[#allocation5 + $0x24] sm:$0xf]
    %v73 = vld [vmem:[#allocation5 + $0x28] sm:$0xf]
    %v74 = vld [vmem:[#allocation5 + $0x2c] sm:$0xf]
    %v75 = vld [vmem:[#allocation5 + $0x30] sm:$0xf]
    %v76 = vld [vmem:[#allocation5 + $0x34] sm:$0xf]
    %v77 = vld [vmem:[#allocation5 + $0x38] sm:$0xf]
    %v78 = vld [vmem:[#allocation5 + $0x3c] sm:$0xf]
    %v79 = vperm.slane %v62, 0
    %v82 = vunpack.c.l.b16 %v60
    %v83 = vunpack.c.l.b16 %v61
    %v84 = vpack.c.b16 %v83, %v82
    %v102 = vunpack.c.l.b16 %v63
    %v103 = vunpack.c.l.b16 %v64
    %v104 = vunpack.c.l.b16 %v65
    %v105 = vunpack.c.l.b16 %v66
    %v106 = vunpack.c.l.b16 %v67
    %v107 = vunpack.c.l.b16 %v68
    %v108 = vunpack.c.l.b16 %v69
    %v109 = vunpack.c.l.b16 %v70
    %v110 = vunpack.c.l.b16 %v71
    %v111 = vunpack.c.l.b16 %v72
    %v112 = vunpack.c.l.b16 %v73
    %v113 = vunpack.c.l.b16 %v74
    %v114 = vunpack.c.l.b16 %v75
    %v115 = vunpack.c.l.b16 %v76
    %v116 = vunpack.c.l.b16 %v77
    %v117 = vunpack.c.l.b16 %v78
    %v118 = vpack.c.b16 %v103, %v102
    %v119 = vpack.c.b16 %v105, %v104
    %v120 = vpack.c.b16 %v107, %v106
    %v121 = vpack.c.b16 %v109, %v108
    %v122 = vpack.c.b16 %v111, %v110
    %v123 = vpack.c.b16 %v113, %v112
    %v124 = vpack.c.b16 %v115, %v114
    %v125 = vpack.c.b16 %v117, %v116
    %134 = vmatpush.bf16.msra.mxu0 %v125
    %135 = vmatpush.bf16.msra.mxu0 %v124
    %136 = vmatpush.bf16.msra.mxu0 %v123
    %137 = vmatpush.bf16.msra.mxu0 %v122
    %138 = vmatpush.bf16.msra.mxu0 %v121
    %139 = vmatpush.bf16.msra.mxu0 %v120
    %140 = vmatpush.bf16.msra.mxu0 %v119
    %141 = vmatpush.bf16.msra.mxu0 %v118
    %142 = vmatmul.bf16.gmra.mxu0 %v84
    %v143 = vpop.f32.mrf.mxu0
    %v144 = vadd.f32 %v79, %v143
    %v145 = vpop.f32.mrf.mxu0
    %v146 = vadd.f32 %v79, %v145
    %147 = vdwg.mxu0
    %v148 = vmax.f32 %v144, 0.0
    %v149 = vmax.f32 %v146, 0.0
    %v150 = vpack.c.bf16 %v149, %v148
    %s151 = scalar_lea.vmem [#allocation5], 64
    %v152 = vld [vmem:[%s151] sm:$0xf]
    %v153 = vld [vmem:[%s151 + $0x4] sm:$0xf]
    %v154 = vld [vmem:[%s151 + $0x8] sm:$0xf]
    %v155 = vld [vmem:[%s151 + $0xc] sm:$0xf]
    %v156 = vld [vmem:[%s151 + $0x10] sm:$0xf]
    %v157 = vld [vmem:[%s151 + $0x14] sm:$0xf]
    %v158 = vld [vmem:[%s151 + $0x18] sm:$0xf]
    %v159 = vld [vmem:[%s151 + $0x1c] sm:$0xf]
    %v160 = vld [vmem:[%s151 + $0x20] sm:$0xf]
    %v161 = vld [vmem:[%s151 + $0x24] sm:$0xf]
    %v162 = vld [vmem:[%s151 + $0x28] sm:$0xf]
    %v163 = vld [vmem:[%s151 + $0x2c] sm:$0xf]
    %v164 = vld [vmem:[%s151 + $0x30] sm:$0xf]
    %v165 = vld [vmem:[%s151 + $0x34] sm:$0xf]
    %v166 = vld [vmem:[%s151 + $0x38] sm:$0xf]
    %v167 = vld [vmem:[%s151 + $0x3c] sm:$0xf]
    %v168 = vperm.slane %v62, 1
    %v185 = vunpack.c.l.b16 %v152
    %v186 = vunpack.c.l.b16 %v153
    %v187 = vunpack.c.l.b16 %v154
    %v188 = vunpack.c.l.b16 %v155
    %v189 = vunpack.c.l.b16 %v156
    %v190 = vunpack.c.l.b16 %v157
    %v191 = vunpack.c.l.b16 %v158
    %v192 = vunpack.c.l.b16 %v159
    %v193 = vunpack.c.l.b16 %v160
    %v194 = vunpack.c.l.b16 %v161
    %v195 = vunpack.c.l.b16 %v162
    %v196 = vunpack.c.l.b16 %v163
    %v197 = vunpack.c.l.b16 %v164
    %v198 = vunpack.c.l.b16 %v165
    %v199 = vunpack.c.l.b16 %v166
    %v200 = vunpack.c.l.b16 %v167
    %v201 = vpack.c.b16 %v186, %v185
    %v202 = vpack.c.b16 %v188, %v187
    %v203 = vpack.c.b16 %v190, %v189
    %v204 = vpack.c.b16 %v192, %v191
    %v205 = vpack.c.b16 %v194, %v193
    %v206 = vpack.c.b16 %v196, %v195
    %v207 = vpack.c.b16 %v198, %v197
    %v208 = vpack.c.b16 %v200, %v199
    %217 = vmatpush.bf16.msra.mxu0 %v208
    %218 = vmatpush.bf16.msra.mxu0 %v207
    %219 = vmatpush.bf16.msra.mxu0 %v206
    %220 = vmatpush.bf16.msra.mxu0 %v205
    %221 = vmatpush.bf16.msra.mxu0 %v204
    %222 = vmatpush.bf16.msra.mxu0 %v203
    %223 = vmatpush.bf16.msra.mxu0 %v202
    %224 = vmatpush.bf16.msra.mxu0 %v201
    %225 = vmatmul.bf16.gmra.mxu0 %v150
    %v226 = vpop.f32.mrf.mxu0
    %v227 = vadd.f32 %v168, %v226
    %v228 = vpop.f32.mrf.mxu0
    %v229 = vadd.f32 %v168, %v228
    %230 = vdwg.mxu0
    %v231 = vmax.f32 %v227, 0.0
    %v232 = vmax.f32 %v229, 0.0
    %v233 = vpack.c.bf16 %v232, %v231
    %s234 = scalar_lea.vmem [#allocation5], 128
    %v235 = vld [vmem:[%s234] sm:$0xf]
    %v236 = vld [vmem:[%s234 + $0x4] sm:$0xf]
    %v237 = vld [vmem:[%s234 + $0x8] sm:$0xf]
    %v238 = vld [vmem:[%s234 + $0xc] sm:$0xf]
    %v239 = vld [vmem:[%s234 + $0x10] sm:$0xf]
    %v240 = vld [vmem:[%s234 + $0x14] sm:$0xf]
    %v241 = vld [vmem:[%s234 + $0x18] sm:$0xf]
    %v242 = vld [vmem:[%s234 + $0x1c] sm:$0xf]
    %v243 = vld [vmem:[%s234 + $0x20] sm:$0xf]
    %v244 = vld [vmem:[%s234 + $0x24] sm:$0xf]
    %v245 = vld [vmem:[%s234 + $0x28] sm:$0xf]
    %v246 = vld [vmem:[%s234 + $0x2c] sm:$0xf]
    %v247 = vld [vmem:[%s234 + $0x30] sm:$0xf]
    %v248 = vld [vmem:[%s234 + $0x34] sm:$0xf]
    %v249 = vld [vmem:[%s234 + $0x38] sm:$0xf]
    %v250 = vld [vmem:[%s234 + $0x3c] sm:$0xf]
    %v251 = vperm.slane %v62, 2
    %v268 = vunpack.c.l.b16 %v235
    %v269 = vunpack.c.l.b16 %v236
    %v270 = vunpack.c.l.b16 %v237
    %v271 = vunpack.c.l.b16 %v238
    %v272 = vunpack.c.l.b16 %v239
    %v273 = vunpack.c.l.b16 %v240
    %v274 = vunpack.c.l.b16 %v241
    %v275 = vunpack.c.l.b16 %v242
    %v276 = vunpack.c.l.b16 %v243
    %v277 = vunpack.c.l.b16 %v244
    %v278 = vunpack.c.l.b16 %v245
    %v279 = vunpack.c.l.b16 %v246
    %v280 = vunpack.c.l.b16 %v247
    %v281 = vunpack.c.l.b16 %v248
    %v282 = vunpack.c.l.b16 %v249
    %v283 = vunpack.c.l.b16 %v250
    %v284 = vpack.c.b16 %v269, %v268
    %v285 = vpack.c.b16 %v271, %v270
    %v286 = vpack.c.b16 %v273, %v272
    %v287 = vpack.c.b16 %v275, %v274
    %v288 = vpack.c.b16 %v277, %v276
    %v289 = vpack.c.b16 %v279, %v278
    %v290 = vpack.c.b16 %v281, %v280
    %v291 = vpack.c.b16 %v283, %v282
    %300 = vmatpush.bf16.msra.mxu0 %v291
    %301 = vmatpush.bf16.msra.mxu0 %v290
    %302 = vmatpush.bf16.msra.mxu0 %v289
    %303 = vmatpush.bf16.msra.mxu0 %v288
    %304 = vmatpush.bf16.msra.mxu0 %v287
    %305 = vmatpush.bf16.msra.mxu0 %v286
    %306 = vmatpush.bf16.msra.mxu0 %v285
    %307 = vmatpush.bf16.msra.mxu0 %v284
    %308 = vmatmul.bf16.gmra.mxu0 %v233
    %v309 = vpop.f32.mrf.mxu0
    %v310 = vadd.f32 %v251, %v309
    %v311 = vpop.f32.mrf.mxu0
    %v312 = vadd.f32 %v251, %v311
    %313 = vdwg.mxu0
    %v314 = vmax.f32 %v310, 0.0
    %v315 = vmax.f32 %v312, 0.0
    %v316 = vpack.c.bf16 %v315, %v314
    %s317 = scalar_lea.vmem [#allocation5], 192
    %v318 = vld [vmem:[%s317] sm:$0xf]
    %v319 = vld [vmem:[%s317 + $0x4] sm:$0xf]
    %v320 = vld [vmem:[%s317 + $0x8] sm:$0xf]
    %v321 = vld [vmem:[%s317 + $0xc] sm:$0xf]
    %v322 = vld [vmem:[%s317 + $0x10] sm:$0xf]
    %v323 = vld [vmem:[%s317 + $0x14] sm:$0xf]
    %v324 = vld [vmem:[%s317 + $0x18] sm:$0xf]
    %v325 = vld [vmem:[%s317 + $0x1c] sm:$0xf]
    %v326 = vld [vmem:[%s317 + $0x20] sm:$0xf]
    %v327 = vld [vmem:[%s317 + $0x24] sm:$0xf]
    %v328 = vld [vmem:[%s317 + $0x28] sm:$0xf]
    %v329 = vld [vmem:[%s317 + $0x2c] sm:$0xf]
    %v330 = vld [vmem:[%s317 + $0x30] sm:$0xf]
    %v331 = vld [vmem:[%s317 + $0x34] sm:$0xf]
    %v332 = vld [vmem:[%s317 + $0x38] sm:$0xf]
    %v333 = vld [vmem:[%s317 + $0x3c] sm:$0xf]
    %v334 = vperm.slane %v62, 3
    %v351 = vunpack.c.l.b16 %v318
    %v352 = vunpack.c.l.b16 %v319
    %v353 = vunpack.c.l.b16 %v320
    %v354 = vunpack.c.l.b16 %v321
    %v355 = vunpack.c.l.b16 %v322
    %v356 = vunpack.c.l.b16 %v323
    %v357 = vunpack.c.l.b16 %v324
    %v358 = vunpack.c.l.b16 %v325
    %v359 = vunpack.c.l.b16 %v326
    %v360 = vunpack.c.l.b16 %v327
    %v361 = vunpack.c.l.b16 %v328
    %v362 = vunpack.c.l.b16 %v329
    %v363 = vunpack.c.l.b16 %v330
    %v364 = vunpack.c.l.b16 %v331
    %v365 = vunpack.c.l.b16 %v332
    %v366 = vunpack.c.l.b16 %v333
    %v367 = vpack.c.b16 %v352, %v351
    %v368 = vpack.c.b16 %v354, %v353
    %v369 = vpack.c.b16 %v356, %v355
    %v370 = vpack.c.b16 %v358, %v357
    %v371 = vpack.c.b16 %v360, %v359
    %v372 = vpack.c.b16 %v362, %v361
    %v373 = vpack.c.b16 %v364, %v363
    %v374 = vpack.c.b16 %v366, %v365
    %383 = vmatpush.bf16.msra.mxu0 %v374
    %384 = vmatpush.bf16.msra.mxu0 %v373
    %385 = vmatpush.bf16.msra.mxu0 %v372
    %386 = vmatpush.bf16.msra.mxu0 %v371
    %387 = vmatpush.bf16.msra.mxu0 %v370
    %388 = vmatpush.bf16.msra.mxu0 %v369
    %389 = vmatpush.bf16.msra.mxu0 %v368
    %390 = vmatpush.bf16.msra.mxu0 %v367
    %391 = vmatmul.bf16.gmra.mxu0 %v316
    %v392 = vpop.f32.mrf.mxu0
    %v393 = vadd.f32 %v334, %v392
    %v394 = vpop.f32.mrf.mxu0
    %v395 = vadd.f32 %v334, %v394
    %396 = vdwg.mxu0
    %v397 = vlaneseq
    %v398 = vshrl.u32 %v397, 7
    %v399 = vadd.s32 %v398, 8
    %vm400 = vcmp.lt.s32.totalorder %v398, 8
    %vm401 = vcmp.lt.s32.totalorder %v399, 8
    %v402 = vsel %vm400, %v393, 0.0
    %v403 = vsel %vm401, %v395, 0.0
    %406 = vrot.lane.b32.xlu0 %v402, 122
    %v407 = vpop.permute.xlu0 %406
    %408 = vrot.lane.b32.xlu0 %v403, 122
    %v409 = vpop.permute.xlu0 %408
    %vm412 = vcmask 7168
    %v413 = vsel %vm412, %v407, 0.0
    %v414 = vsel %vm412, %v409, 0.0
    %v415 = vadd.f32 %v413, %v414
    %416 = vadd.xlane.f32.xlu0 %v415
    %v417 = vpop.xlane.xlu0 %416
    %v418 = vrot.slane %v417, 4
    %v419 = vadd.f32 %v417, %v418
    %v420 = vrot.slane %v419, 2
    %v421 = vadd.f32 %v419, %v420
    %v422 = vrot.slane %v421, 1
    %v423 = vadd.f32 %v421, %v422
    %s424 = vtos %v423
    %s425 = smul.f32 %s424, 0.025
    %427 = vset.pattern.permute.xlu0 0
    %428 = vperm.xlu0 %427, %v393
    %v429 = vpop.permute.xlu0 %428
    %432 = vset.pattern.permute.xlu0 0
    %433 = vperm.xlu0 %432, %v395
    %v434 = vpop.permute.xlu0 %433
    %v436 = vadd.f32 %v393, %v429
    %v437 = vadd.f32 %v395, %v434
    %v438 = vstv %s425
    %v439 = vsub.f32 %v436, %v438
    %v440 = vsub.f32 %v437, %v438
    %441 = vst [vmem:[#allocation8] sm:$0xff] %v439
    %442 = vst [vmem:[#allocation8 + $0x8] sm:$0xff] %v440
    // Predicated region
    $region26: #{tpu_custom_call.1} parent=1 // pred_check
      _
    $region27: #{tpu_custom_call.1} parent=1 // pred_check_branch
      %444 = sbr.rel (0) target = $region29
    $region28: #{tpu_custom_call.1} parent=1 // pred_region
      %446 = vsyncadd [#allocation4], 0
      %s447 = sshll.u32 [#allocation8], 4
      %s448 = int_to_ptr.vmem [resolvable:$true] %s447
      %s449 = sshll.u32 %s3, 4
      %s450 = int_to_ptr.hbm [resolvable:$true] %s449
      %455 = dma.vmem_to_hbm [thread:$0]  %s448, 256, %s450, [#allocation4], 128, 128, 8
    $region29: #{tpu_custom_call.1} parent=1 // pred_fallthru
      _
    // Predicated region
    $region30: #{tpu_custom_call.1} parent=1 // pred_check
      _
    $region31: #{tpu_custom_call.1} parent=1 // pred_check_branch
      %457 = sbr.rel (0) target = $region33
    $region32: #{tpu_custom_call.1} parent=1 // pred_region
      %459 = dma.done [#allocation4], 256
    $region33: #{tpu_custom_call.1} parent=1 // pred_fallthru
      _
    %460 = vsyncpa [#allocation3], 1
    %461 = vsyncpa [#allocation6], 1
    %462 = vsyncpa [#allocation4], 1

</llo_original>
